<compile_context>
chip_gen: v6e
topology: v6e:2x2x1
jax: 0.10.0
libtpu: 0.0.40
codegen_flags: <defaults>
</compile_context>

<pallas_src>
import functools

import jax
import jax.numpy as jnp
from jax.experimental import pallas as pl
from jax.experimental.pallas import tpu as pltpu

NEG_SLOPE = 0.01   # PyTorch nn.LeakyReLU default negative_slope
KH = 3             # 3x3 conv
KW = 3


def conv3x3_lrelu_kernel(x_ref, wb_ref, b_ref, o_ref, *, img_h, w_cout):
    """Fused 3x3 conv (padding=1) + bias + LeakyReLU.

    x_ref : (M, Cin*W)         bf16, M = N*H rows (batch folded into rows)
    wb_ref: (Cin*W, 3*W*Cout)  bf16, per-kh slabs stacked along lanes
    b_ref : (1, W*Cout)        f32, bias tiled over W
    o_ref : (M, W*Cout)        f32 output
    """
    m = x_ref.shape[0]

    # Single MXU push: K = Cin*W (=128), N = 3*W*Cout (=384).
    y = jnp.dot(x_ref[...], wb_ref[...], preferred_element_type=jnp.float32)

    # Per-kh result slabs; slices are 128-lane aligned (vreg-aligned).
    y_k0 = y[:, 0 * w_cout:1 * w_cout]   # kh = 0: computed at row r, lands in out row r+1
    y_k1 = y[:, 1 * w_cout:2 * w_cout]   # kh = 1: lands in out row r
    y_k2 = y[:, 2 * w_cout:3 * w_cout]   # kh = 2: lands in out row r-1

    # out[h] = y_k0[h-1] + y_k1[h] + y_k2[h+1], zero outside each H-row image.
    # Realign with sublane rolls (XLU) and mask the first/last row of every
    # image so the wrap-around (and the folded batch boundary) contributes 0,
    # reproducing the zero H-padding exactly.
    row = jax.lax.broadcasted_iota(jnp.int32, (m, w_cout), 0)
    h_in_img = row % img_h
    y_k0_dn = pltpu.roll(y_k0, 1, 0)        # [h] <- y_k0[h-1]  (wraps)
    y_k2_up = pltpu.roll(y_k2, m - 1, 0)    # [h] <- y_k2[h+1]  (wraps)

    acc = y_k1
    acc = acc + jnp.where(h_in_img == 0, 0.0, y_k0_dn)
    acc = acc + jnp.where(h_in_img == img_h - 1, 0.0, y_k2_up)

    acc = acc + b_ref[...]                               # (1, W*Cout) broadcast over rows
    acc = jnp.where(acc >= 0, acc, NEG_SLOPE * acc)      # LeakyReLU(0.01)
    o_ref[...] = acc.astype(o_ref.dtype)


def prepare_block_params(weight_oihw, bias, W, compute_dtype=jnp.bfloat16):
    """Fold kw shift / W-edge zero padding / channel contraction into one RHS.

    wb[ci*W + w_in, kh*W*Cout + w_out*Cout + co] =
        weight[co, ci, kh, w_in - w_out + 1]  if that tap exists, else 0.

    Returns:
      wb     : (Cin*W, KH*W*Cout) compute_dtype — kh slabs stacked along lanes
      b_flat : (1, W*Cout)        f32           — bias tiled over W
    Run once per weight update, not per forward.
    """
    Cout, Cin, kh, kw = weight_oihw.shape
    assert (kh, kw) == (KH, KW)
    w_hwio = jnp.transpose(weight_oihw, (2, 3, 1, 0))                  # (KH, KW, Cin, Cout)
    kw_idx = jnp.arange(W)[:, None] - jnp.arange(W)[None, :] + (KW // 2)
    valid = (kw_idx >= 0) & (kw_idx < KW)
    wb = w_hwio[:, jnp.clip(kw_idx, 0, KW - 1), :, :]                  # (KH, Win, Wout, Cin, Cout)
    wb = wb * valid[None, :, :, None, None].astype(wb.dtype)
    wb = jnp.transpose(wb, (0, 3, 1, 2, 4)).reshape(KH, Cin * W, W * Cout)
    wb = jnp.transpose(wb, (1, 0, 2)).reshape(Cin * W, KH * W * Cout)  # stack kh along lanes
    b_flat = jnp.tile(bias.astype(jnp.float32), W).reshape(1, W * Cout)
    return wb.astype(compute_dtype), b_flat


def block_forward(x_nchw, wb, b_flat, compute_dtype=jnp.bfloat16):
    """Conv2d(3x3, padding=1) + LeakyReLU, matching the PyTorch Block.forward."""
    N, Cin, H, W = x_nchw.shape
    w_cout = b_flat.shape[1]
    Cout = w_cout // W
    M = N * H

    # NCHW -> lane-dense rows (layout plumbing only at this size; at scale
    # keep the model in this (N*H, Cin*W) layout end-to-end).
    x_rows = jnp.transpose(x_nchw, (0, 2, 1, 3)).reshape(M, Cin * W).astype(compute_dtype)

    kernel = functools.partial(conv3x3_lrelu_kernel, img_h=H, w_cout=w_cout)
    out_flat = pl.pallas_call(
        kernel,
        out_shape=jax.ShapeDtypeStruct((M, w_cout), x_nchw.dtype),
        grid=(1,),   # launch-bound at this size: batch folded into M, grid collapsed
        in_specs=[
            pl.BlockSpec((M, Cin * W), lambda i: (0, 0)),
            pl.BlockSpec((Cin * W, KH * w_cout), lambda i: (0, 0)),
            pl.BlockSpec((1, w_cout), lambda i: (0, 0)),
        ],
        out_specs=pl.BlockSpec((M, w_cout), lambda i: (0, 0)),
        compiler_params=pltpu.CompilerParams(dimension_semantics=("arbitrary",)),
    )(x_rows, wb, b_flat)

    # Lane-dense (N*H, W*Cout) -> NCHW (layout plumbing only).
    return jnp.transpose(out_flat.reshape(N, H, W, Cout), (0, 3, 1, 2))


if __name__ == "__main__":
    # Block(dim=4, dim_out=8, time_steps=(0, 1)) -> Conv2d(8, 8, 3, padding=1) + LeakyReLU
    dim = 4
    time_steps = (0, 1)
    dim_out = 8
    in_ch = dim * len(time_steps)

    N, H, W = 2, 16, 16

    key = jax.random.PRNGKey(0)
    kx, kwt, kb = jax.random.split(key, 3)

    x = jax.random.normal(kx, (N, in_ch, H, W), dtype=jnp.float32)
    weight = jax.random.normal(kwt, (dim_out, in_ch, 3, 3), dtype=jnp.float32) * 0.1
    bias = jax.random.normal(kb, (dim_out,), dtype=jnp.float32) * 0.1

    # Parameter preprocessing hoisted out of the forward path (once per weight update).
    wb, b_flat = prepare_block_params(weight, bias, W)

    fwd = jax.jit(block_forward)
    out = jax.block_until_ready(fwd(x, wb, b_flat))

    # Reference: XLA conv on the same bf16-rounded operands (the kernel's MXU
    # computes exact f32 products of bf16 inputs with f32 accumulation).
    x_r = x.astype(jnp.bfloat16).astype(jnp.float32)
    w_r = weight.astype(jnp.bfloat16).astype(jnp.float32)
    ref = jax.lax.conv_general_dilated(
        x_r, w_r, window_strides=(1, 1), padding=((1, 1), (1, 1)),
        dimension_numbers=("NCHW", "OIHW", "NCHW"),
        precision=jax.lax.Precision.HIGHEST)
    ref = ref + bias.reshape(1, dim_out, 1, 1)
    ref = jnp.where(ref >= 0, ref, NEG_SLOPE * ref)

    assert out.shape == (N, dim_out, H, W)
    max_err = float(jnp.max(jnp.abs(out - ref)))
    assert jnp.allclose(out, ref, atol=2e-3, rtol=2e-3), max_err

    print("KERNEL_OK")
</pallas_src>

<mosaic_0001>
module attributes {stable_mosaic.version = 11 : i64} {
  func.func @conv3x3_lrelu_kernel(%arg0: i32, %arg1: memref<32x128xbf16, #tpu.memory_space<vmem>>, %arg2: memref<128x384xbf16, #tpu.memory_space<vmem>>, %arg3: memref<1x128xf32, #tpu.memory_space<vmem>>, %arg4: memref<32x128xf32, #tpu.memory_space<vmem>>) attributes {dimension_semantics = [#tpu.dimension_semantics<arbitrary>], iteration_bounds = array<i64: 1>, scalar_prefetch = 0 : i64, scratch_operands = 0 : i64, tpu.core_type = #tpu.core_type<tc>, window_params = [{pipeline_mode = #tpu.pipeline_mode<synchronous>, transform_indices = @transform_0, window_bounds = array<i64: 32, 128>}, {pipeline_mode = #tpu.pipeline_mode<synchronous>, transform_indices = @transform_1, window_bounds = array<i64: 128, 384>}, {pipeline_mode = #tpu.pipeline_mode<synchronous>, transform_indices = @transform_2, window_bounds = array<i64: 1, 128>}, {pipeline_mode = #tpu.pipeline_mode<synchronous>, transform_indices = @transform_3, window_bounds = array<i64: 32, 128>}]} {
    %c0 = arith.constant 0 : index
    %c0_0 = arith.constant 0 : index
    %0 = vector.load %arg1[%c0, %c0_0] : memref<32x128xbf16, #tpu.memory_space<vmem>>, vector<32x128xbf16>
    %c0_1 = arith.constant 0 : index
    %c0_2 = arith.constant 0 : index
    %1 = vector.load %arg2[%c0_1, %c0_2] : memref<128x384xbf16, #tpu.memory_space<vmem>>, vector<128x384xbf16>
    %cst = arith.constant dense<0.000000e+00> : vector<32x384xf32>
    %2 = tpu.matmul %0, %1, %cst {dimension_numbers = #tpu.dot_dimension_numbers<[1], [0], [0], [1], [0, 0, 1, 1], [], []>} : vector<32x128xbf16>, vector<128x384xbf16>, vector<32x384xf32> -> vector<32x384xf32>
    %3 = vector.extract_strided_slice %2 {offsets = [0, 0], sizes = [32, 128], strides = [1, 1]} : vector<32x384xf32> to vector<32x128xf32>
    %4 = vector.extract_strided_slice %2 {offsets = [0, 128], sizes = [32, 128], strides = [1, 1]} : vector<32x384xf32> to vector<32x128xf32>
    %5 = vector.extract_strided_slice %2 {offsets = [0, 256], sizes = [32, 128], strides = [1, 1]} : vector<32x384xf32> to vector<32x128xf32>
    %6 = tpu.iota {dimensions = array<i32: 0>} : vector<32x128xi32>
    %c16_i32 = arith.constant 16 : i32
    %c0_i32 = arith.constant 0 : i32
    %7 = arith.cmpi eq, %c16_i32, %c0_i32 : i32
    %c1_i32 = arith.constant 1 : i32
    %8 = arith.select %7, %c1_i32, %c16_i32 : i32
    %9 = vector.broadcast %8 : i32 to vector<32x128xi32>
    %10 = arith.remsi %6, %9 : vector<32x128xi32>
    %c0_i32_3 = arith.constant 0 : i32
    %11 = vector.broadcast %c0_i32_3 : i32 to vector<32x128xi32>
    %12 = arith.cmpi ne, %10, %11 : vector<32x128xi32>
    %c0_i32_4 = arith.constant 0 : i32
    %13 = vector.broadcast %c0_i32_4 : i32 to vector<32x128xi32>
    %14 = arith.cmpi slt, %10, %13 : vector<32x128xi32>
    %c0_i32_5 = arith.constant 0 : i32
    %15 = arith.cmpi slt, %8, %c0_i32_5 : i32
    %16 = vector.broadcast %15 : i1 to vector<32x128xi1>
    %17 = vector.broadcast %16 : vector<32x128xi1> to vector<32x128xi1>
    %18 = arith.xori %14, %17 : vector<32x128xi1>
    %19 = arith.andi %18, %12 : vector<32x128xi1>
    %20 = vector.broadcast %8 : i32 to vector<32x128xi32>
    %21 = arith.addi %10, %20 : vector<32x128xi32>
    %22 = arith.select %19, %21, %10 : vector<32x128xi1>, vector<32x128xi32>
    %c1_i32_6 = arith.constant 1 : i32
    %23 = tpu.dynamic_rotate %3 by %c1_i32_6 dim 0 : vector<32x128xf32>, i32 -> vector<32x128xf32>
    %c31_i32 = arith.constant 31 : i32
    %24 = tpu.dynamic_rotate %5 by %c31_i32 dim 0 : vector<32x128xf32>, i32 -> vector<32x128xf32>
    %c0_i32_7 = arith.constant 0 : i32
    %25 = vector.broadcast %c0_i32_7 : i32 to vector<32x128xi32>
    %26 = arith.cmpi eq, %22, %25 : vector<32x128xi32>
    %cst_8 = arith.constant 0.000000e+00 : f32
    %27 = vector.broadcast %cst_8 : f32 to vector<32x128xf32>
    %28 = arith.select %26, %27, %23 : vector<32x128xi1>, vector<32x128xf32>
    %29 = arith.addf %4, %28 : vector<32x128xf32>
    %c15_i32 = arith.constant 15 : i32
    %30 = vector.broadcast %c15_i32 : i32 to vector<32x128xi32>
    %31 = arith.cmpi eq, %22, %30 : vector<32x128xi32>
    %cst_9 = arith.constant 0.000000e+00 : f32
    %32 = vector.broadcast %cst_9 : f32 to vector<32x128xf32>
    %33 = arith.select %31, %32, %24 : vector<32x128xi1>, vector<32x128xf32>
    %34 = arith.addf %29, %33 : vector<32x128xf32>
    %c0_10 = arith.constant 0 : index
    %c0_11 = arith.constant 0 : index
    %35 = vector.load %arg3[%c0_10, %c0_11] : memref<1x128xf32, #tpu.memory_space<vmem>>, vector<1x128xf32>
    %36 = vector.broadcast %35 : vector<1x128xf32> to vector<32x128xf32>
    %37 = arith.addf %34, %36 : vector<32x128xf32>
    %cst_12 = arith.constant 0.000000e+00 : f32
    %38 = vector.broadcast %cst_12 : f32 to vector<32x128xf32>
    %39 = arith.cmpf oge, %37, %38 : vector<32x128xf32>
    %cst_13 = arith.constant 0.00999999977 : f32
    %40 = vector.broadcast %cst_13 : f32 to vector<32x128xf32>
    %41 = arith.mulf %40, %37 : vector<32x128xf32>
    %42 = arith.select %39, %37, %41 : vector<32x128xi1>, vector<32x128xf32>
    %c0_14 = arith.constant 0 : index
    %c0_15 = arith.constant 0 : index
    %43 = vector.load %arg4[%c0_14, %c0_15] : memref<32x128xf32, #tpu.memory_space<vmem>>, vector<32x128xf32>
    tpu.vector_store %arg4[%c0_14, %c0_15], %42 {strides = array<i32>} : memref<32x128xf32, #tpu.memory_space<vmem>>, vector<32x128xf32>,
    return
  }
  func.func @transform_0(%arg0: i32) -> (i32, i32) {
    %c0_i32 = arith.constant 0 : i32
    %c0_i32_0 = arith.constant 0 : i32
    %c0_i32_1 = arith.constant 0 : i32
    return %c0_i32, %c0_i32_0 : i32, i32
  }
  func.func @transform_1(%arg0: i32) -> (i32, i32) {
    %c0_i32 = arith.constant 0 : i32
    %c0_i32_0 = arith.constant 0 : i32
    %c0_i32_1 = arith.constant 0 : i32
    return %c0_i32, %c0_i32_0 : i32, i32
  }
  func.func @transform_2(%arg0: i32) -> (i32, i32) {
    %c0_i32 = arith.constant 0 : i32
    %c0_i32_0 = arith.constant 0 : i32
    %c0_i32_1 = arith.constant 0 : i32
    return %c0_i32, %c0_i32_0 : i32, i32
  }
  func.func @transform_3(%arg0: i32) -> (i32, i32) {
    %c0_i32 = arith.constant 0 : i32
    %c0_i32_0 = arith.constant 0 : i32
    %c0_i32_1 = arith.constant 0 : i32
    return %c0_i32, %c0_i32_0 : i32, i32
  }
}

</mosaic_0001>

<llo_original>
// kernel: block_forward.1
$region0: #{block_forward.1}
  #allocation0 [shape = 'u32[]', space=smem, size = 0x4, offset = 0x4, fixed_abs, tag = 'smem constant byte address 0x4 - core index']
  #allocation1 [shape = 'u32[144,128]{1,0:T(1,128)}', space=vmem, size = 0x12000, scoped, tag = 'internal scratch']
  %s0 = inlined_call_operand.vmem [shape: bf16[32,128], index: 0, kind: input, shape index: {}]
  %s1 = inlined_call_operand.vmem [shape: bf16[128,384], index: 1, kind: input, shape index: {}]
  %s2 = inlined_call_operand.vmem [shape: f32[1,128], index: 2, kind: input, shape index: {}]
  %s3 = inlined_call_operand.vmem [shape: f32[32,128], index: 3, kind: output, shape index: {}]
  %s4 = sld [smem:[#allocation0]]
  $region22: #{block_forward.1} parent=0
    _
  %s6 = ssub.s32 1, %s4
  %s7 = scalar_select 0, %s6, %s4
  // Predicated region
  $region2: #{block_forward.1} parent=0 // pred_check
    _
  $region3: #{block_forward.1} parent=0 // pred_check_branch
    %9 = sbr.rel (0) target = $region5
  $region4: #{block_forward.1} parent=0 // pred_region
    _
  $region5: #{block_forward.1} parent=0 // pred_fallthru
    _
  // Predicated region
  $region6: #{block_forward.1} parent=0 // pred_check
    _
  $region7: #{block_forward.1} parent=0 // pred_check_branch
    %11 = sbr.rel (0) target = $region9
  $region8: #{block_forward.1} parent=0 // pred_region
    _
  $region9: #{block_forward.1} parent=0 // pred_fallthru
    _
  // Predicated region
  $region10: #{block_forward.1} parent=0 // pred_check
    _
  $region11: #{block_forward.1} parent=0 // pred_check_branch
    %13 = sbr.rel (0) target = $region13
  $region12: #{block_forward.1} parent=0 // pred_region
    _
  $region13: #{block_forward.1} parent=0 // pred_fallthru
    _
  %v15 = vld [vmem:[%s0] sm:$0xf]
  %v16 = vld [vmem:[%s0 + $0x4] sm:$0xf]
  %v17 = vld [vmem:[%s0 + $0x8] sm:$0xf]
  %v18 = vld [vmem:[%s0 + $0xc] sm:$0xf]
  %v19 = vld [vmem:[%s1] sm:$0xff]
  %v20 = vld [vmem:[%s1 + $0x8] sm:$0xf]
  %v21 = vld [vmem:[%s1 + $0xc] sm:$0xff]
  %v22 = vld [vmem:[%s1 + $0x14] sm:$0xf]
  %v23 = vld [vmem:[%s1 + $0x18] sm:$0xff]
  %v24 = vld [vmem:[%s1 + $0x20] sm:$0xf]
  %v25 = vld [vmem:[%s1 + $0x24] sm:$0xff]
  %v26 = vld [vmem:[%s1 + $0x2c] sm:$0xf]
  %v27 = vld [vmem:[%s1 + $0x30] sm:$0xff]
  %v28 = vld [vmem:[%s1 + $0x38] sm:$0xf]
  %v29 = vld [vmem:[%s1 + $0x3c] sm:$0xff]
  %v30 = vld [vmem:[%s1 + $0x44] sm:$0xf]
  %v31 = vld [vmem:[%s1 + $0x48] sm:$0xff]
  %v32 = vld [vmem:[%s1 + $0x50] sm:$0xf]
  %v33 = vld [vmem:[%s1 + $0x54] sm:$0xff]
  %v34 = vld [vmem:[%s1 + $0x5c] sm:$0xf]
  %v35 = vld [vmem:[%s1 + $0x60] sm:$0xff]
  %v36 = vld [vmem:[%s1 + $0x68] sm:$0xf]
  %v37 = vld [vmem:[%s1 + $0x6c] sm:$0xff]
  %v38 = vld [vmem:[%s1 + $0x74] sm:$0xf]
  %v39 = vld [vmem:[%s1 + $0x78] sm:$0xff]
  %v40 = vld [vmem:[%s1 + $0x80] sm:$0xf]
  %v41 = vld [vmem:[%s1 + $0x84] sm:$0xff]
  %v42 = vld [vmem:[%s1 + $0x8c] sm:$0xf]
  %v43 = vld [vmem:[%s1 + $0x90] sm:$0xff]
  %v44 = vld [vmem:[%s1 + $0x98] sm:$0xf]
  %v45 = vld [vmem:[%s1 + $0x9c] sm:$0xff]
  %v46 = vld [vmem:[%s1 + $0xa4] sm:$0xf]
  %v47 = vld [vmem:[%s1 + $0xa8] sm:$0xff]
  %v48 = vld [vmem:[%s1 + $0xb0] sm:$0xf]
  %v49 = vld [vmem:[%s1 + $0xb4] sm:$0xff]
  %v50 = vld [vmem:[%s1 + $0xbc] sm:$0xf]
  %v55 = vunpack.c.l.b16 %v15
  %v56 = vunpack.c.l.b16 %v16
  %v57 = vunpack.c.l.b16 %v17
  %v58 = vunpack.c.l.b16 %v18
  %v59 = vpack.c.b16 %v56, %v55
  %v60 = vpack.c.b16 %v58, %v57
  %v95 = vunpack.c.l.b16 %v19
  %v96 = vunpack.c.h.b16 %v19
  %v97 = vunpack.c.l.b16 %v20
  %v98 = vunpack.c.l.b16 %v21
  %v99 = vunpack.c.h.b16 %v21
  %v100 = vunpack.c.l.b16 %v22
  %v101 = vunpack.c.l.b16 %v23
  %v102 = vunpack.c.h.b16 %v23
  %v103 = vunpack.c.l.b16 %v24
  %v104 = vunpack.c.l.b16 %v25
  %v105 = vunpack.c.h.b16 %v25
  %v106 = vunpack.c.l.b16 %v26
  %v107 = vunpack.c.l.b16 %v27
  %v108 = vunpack.c.h.b16 %v27
  %v109 = vunpack.c.l.b16 %v28
  %v110 = vunpack.c.l.b16 %v29
  %v111 = vunpack.c.h.b16 %v29
  %v112 = vunpack.c.l.b16 %v30
  %v113 = vunpack.c.l.b16 %v31
  %v114 = vunpack.c.h.b16 %v31
  %v115 = vunpack.c.l.b16 %v32
  %v116 = vunpack.c.l.b16 %v33
  %v117 = vunpack.c.h.b16 %v33
  %v118 = vunpack.c.l.b16 %v34
  %v119 = vunpack.c.l.b16 %v35
  %v120 = vunpack.c.h.b16 %v35
  %v121 = vunpack.c.l.b16 %v36
  %v122 = vunpack.c.l.b16 %v37
  %v123 = vunpack.c.h.b16 %v37
  %v124 = vunpack.c.l.b16 %v38
  %v125 = vunpack.c.l.b16 %v39
  %v126 = vunpack.c.h.b16 %v39
  %v127 = vunpack.c.l.b16 %v40
  %v128 = vunpack.c.l.b16 %v41
  %v129 = vunpack.c.h.b16 %v41
  %v130 = vunpack.c.l.b16 %v42
  %v131 = vunpack.c.l.b16 %v43
  %v132 = vunpack.c.h.b16 %v43
  %v133 = vunpack.c.l.b16 %v44
  %v134 = vunpack.c.l.b16 %v45
  %v135 = vunpack.c.h.b16 %v45
  %v136 = vunpack.c.l.b16 %v46
  %v137 = vunpack.c.l.b16 %v47
  %v138 = vunpack.c.h.b16 %v47
  %v139 = vunpack.c.l.b16 %v48
  %v140 = vunpack.c.l.b16 %v49
  %v141 = vunpack.c.h.b16 %v49
  %v142 = vunpack.c.l.b16 %v50
  %v143 = vpack.c.b16 %v98, %v95
  %v144 = vpack.c.b16 %v99, %v96
  %v145 = vpack.c.b16 %v100, %v97
  %v146 = vpack.c.b16 %v104, %v101
  %v147 = vpack.c.b16 %v105, %v102
  %v148 = vpack.c.b16 %v106, %v103
  %v149 = vpack.c.b16 %v110, %v107
  %v150 = vpack.c.b16 %v111, %v108
  %v151 = vpack.c.b16 %v112, %v109
  %v152 = vpack.c.b16 %v116, %v113
  %v153 = vpack.c.b16 %v117, %v114
  %v154 = vpack.c.b16 %v118, %v115
  %v155 = vpack.c.b16 %v122, %v119
  %v156 = vpack.c.b16 %v123, %v120
  %v157 = vpack.c.b16 %v124, %v121
  %v158 = vpack.c.b16 %v128, %v125
  %v159 = vpack.c.b16 %v129, %v126
  %v160 = vpack.c.b16 %v130, %v127
  %v161 = vpack.c.b16 %v134, %v131
  %v162 = vpack.c.b16 %v135, %v132
  %v163 = vpack.c.b16 %v136, %v133
  %v164 = vpack.c.b16 %v140, %v137
  %v165 = vpack.c.b16 %v141, %v138
  %v166 = vpack.c.b16 %v142, %v139
  %191 = vmatprep.subr.bf16.mxu0 %v165
  %192 = vmatpush1.bf16.msra.mxu0 %v164
  %193 = vmatprep.subr.bf16.mxu0 %v162
  %194 = vmatpush1.bf16.msra.mxu0 %v161
  %195 = vmatprep.subr.bf16.mxu0 %v159
  %196 = vmatpush1.bf16.msra.mxu0 %v158
  %197 = vmatprep.subr.bf16.mxu0 %v156
  %198 = vmatpush1.bf16.msra.mxu0 %v155
  %199 = vmatprep.subr.bf16.mxu0 %v153
  %200 = vmatpush1.bf16.msra.mxu0 %v152
  %201 = vmatprep.subr.bf16.mxu0 %v150
  %202 = vmatpush1.bf16.msra.mxu0 %v149
  %203 = vmatprep.subr.bf16.mxu0 %v147
  %204 = vmatpush1.bf16.msra.mxu0 %v146
  %205 = vmatprep.subr.bf16.mxu0 %v144
  %206 = vmatpush1.bf16.msra.mxu0 %v143
  %207 = vmatprep.subr.bf16.mxu0 0
  %208 = vmatpush2.bf16.msra.mxu0 0
  %209 = vmatprep.subr.bf16.mxu0 0
  %210 = vmatpush2.bf16.msra.mxu0 0
  %211 = vmatprep.subr.bf16.mxu0 0
  %212 = vmatpush2.bf16.msra.mxu0 0
  %213 = vmatprep.subr.bf16.mxu0 0
  %214 = vmatpush2.bf16.msra.mxu0 0
  %215 = vmatprep.subr.bf16.mxu0 0
  %216 = vmatpush2.bf16.msra.mxu0 0
  %217 = vmatprep.subr.bf16.mxu0 0
  %218 = vmatpush2.bf16.msra.mxu0 0
  %219 = vmatprep.subr.bf16.mxu0 0
  %220 = vmatpush2.bf16.msra.mxu0 0
  %221 = vmatprep.subr.bf16.mxu0 0
  %222 = vmatpush2.bf16.msra.mxu0 0
  %223 = vmatprep.mubr.bf16.mxu0 0
  %224 = vmatmul.mubr.bf16.gmra.mxu0 %v59
  %v225 = vpop.f32.mrf.mxu0
  %v226 = vadd.f32 0.0, %v225
  %v227 = vpop.f32.mrf.mxu0
  %v228 = vadd.f32 0.0, %v227
  %v229 = vpop.f32.mrf.mxu0
  %v230 = vadd.f32 0.0, %v229
  %v231 = vpop.f32.mrf.mxu0
  %v232 = vadd.f32 0.0, %v231
  %233 = vmatprep.mubr.bf16.mxu0 0
  %234 = vmatmul.mubr.bf16.gmra.mxu0 %v60
  %v235 = vpop.f32.mrf.mxu0
  %v236 = vadd.f32 0.0, %v235
  %v237 = vpop.f32.mrf.mxu0
  %v238 = vadd.f32 0.0, %v237
  %v239 = vpop.f32.mrf.mxu0
  %v240 = vadd.f32 0.0, %v239
  %v241 = vpop.f32.mrf.mxu0
  %v242 = vadd.f32 0.0, %v241
  %243 = vdwg.mxu0
  %244 = vmatprep.subr.bf16.mxu0 0
  %245 = vmatpush1.bf16.msra.mxu0 %v166
  %246 = vmatprep.subr.bf16.mxu0 0
  %247 = vmatpush1.bf16.msra.mxu0 %v163
  %248 = vmatprep.subr.bf16.mxu0 0
  %249 = vmatpush1.bf16.msra.mxu0 %v160
  %250 = vmatprep.subr.bf16.mxu0 0
  %251 = vmatpush1.bf16.msra.mxu0 %v157
  %252 = vmatprep.subr.bf16.mxu0 0
  %253 = vmatpush1.bf16.msra.mxu0 %v154
  %254 = vmatprep.subr.bf16.mxu0 0
  %255 = vmatpush1.bf16.msra.mxu0 %v151
  %256 = vmatprep.subr.bf16.mxu0 0
  %257 = vmatpush1.bf16.msra.mxu0 %v148
  %258 = vmatprep.subr.bf16.mxu0 0
  %259 = vmatpush1.bf16.msra.mxu0 %v145
  %260 = vmatprep.subr.bf16.mxu0 0
  %261 = vmatpush2.bf16.msra.mxu0 0
  %262 = vmatprep.subr.bf16.mxu0 0
  %263 = vmatpush2.bf16.msra.mxu0 0
  %264 = vmatprep.subr.bf16.mxu0 0
  %265 = vmatpush2.bf16.msra.mxu0 0
  %266 = vmatprep.subr.bf16.mxu0 0
  %267 = vmatpush2.bf16.msra.mxu0 0
  %268 = vmatprep.subr.bf16.mxu0 0
  %269 = vmatpush2.bf16.msra.mxu0 0
  %270 = vmatprep.subr.bf16.mxu0 0
  %271 = vmatpush2.bf16.msra.mxu0 0
  %272 = vmatprep.subr.bf16.mxu0 0
  %273 = vmatpush2.bf16.msra.mxu0 0
  %274 = vmatprep.subr.bf16.mxu0 0
  %275 = vmatpush2.bf16.msra.mxu0 0
  %276 = vmatprep.mubr.bf16.mxu0 0
  %277 = vmatmul.mubr.bf16.gmra.mxu0 %v59
  %v278 = vpop.f32.mrf.mxu0
  %v279 = vadd.f32 0.0, %v278
  %v280 = vpop.f32.mrf.mxu0
  %v281 = vpop.f32.mrf.mxu0
  %v282 = vadd.f32 0.0, %v281
  %v283 = vpop.f32.mrf.mxu0
  %284 = vmatprep.mubr.bf16.mxu0 0
  %285 = vmatmul.mubr.bf16.gmra.mxu0 %v60
  %v286 = vpop.f32.mrf.mxu0
  %v287 = vadd.f32 0.0, %v286
  %v288 = vpop.f32.mrf.mxu0
  %v289 = vpop.f32.mrf.mxu0
  %v290 = vadd.f32 0.0, %v289
  %v291 = vpop.f32.mrf.mxu0
  %292 = vdwg.mxu0
  %v293 = vlaneseq
  %v294 = vshrl.u32 %v293, 7
  %v295 = vadd.s32 %v294, 8
  %v296 = vadd.s32 %v294, 16
  %v297 = vadd.s32 %v294, 24
  %vm298 = vcmp.lt.s32.totalorder %v294, 0
  %v299 = vsub.s32 0, %v294
  %v300 = vsel %vm298, %v299, %v294
  %v301 = vshrl.u32 %v300, 4
  %v302 = vand.u32 %v300, 15
  %v303 = vsub.s32 0, %v302
  %v304 = vsel %vm298, %v303, %v302
  %vm305 = vcmp.lt.s32.totalorder %v295, 0
  %v306 = vsub.s32 0, %v295
  %v307 = vsel %vm305, %v306, %v295
  %v308 = vshrl.u32 %v307, 4
  %v309 = vand.u32 %v307, 15
  %v310 = vsub.s32 0, %v309
  %v311 = vsel %vm305, %v310, %v309
  %vm312 = vcmp.lt.s32.totalorder %v296, 0
  %v313 = vsub.s32 0, %v296
  %v314 = vsel %vm312, %v313, %v296
  %v315 = vshrl.u32 %v314, 4
  %v316 = vand.u32 %v314, 15
  %v317 = vsub.s32 0, %v316
  %v318 = vsel %vm312, %v317, %v316
  %vm319 = vcmp.lt.s32.totalorder %v297, 0
  %v320 = vsub.s32 0, %v297
  %v321 = vsel %vm319, %v320, %v297
  %v322 = vshrl.u32 %v321, 4
  %v323 = vand.u32 %v321, 15
  %v324 = vsub.s32 0, %v323
  %v325 = vsel %vm319, %v324, %v323
  %vm326 = vcmp.ne.s32.totalorder %v304, 0
  %vm327 = vcmp.ne.s32.totalorder %v311, 0
  %vm328 = vcmp.ne.s32.totalorder %v318, 0
  %vm329 = vcmp.ne.s32.totalorder %v325, 0
  %vm330 = vcmp.lt.s32.totalorder %v304, 0
  %vm331 = vcmp.lt.s32.totalorder %v311, 0
  %vm332 = vcmp.lt.s32.totalorder %v318, 0
  %vm333 = vcmp.lt.s32.totalorder %v325, 0
  %vm334 = vmand %vm330, %vm326
  %vm335 = vmand %vm331, %vm327
  %vm336 = vmand %vm332, %vm328
  %vm337 = vmand %vm333, %vm329
  %v338 = vadd.s32 %v304, 16
  %v339 = vadd.s32 %v311, 16
  %v340 = vadd.s32 %v318, 16
  %v341 = vadd.s32 %v325, 16
  %v342 = vsel %vm334, %v338, %v304
  %v343 = vsel %vm335, %v339, %v311
  %v344 = vsel %vm336, %v340, %v318
  %v345 = vsel %vm337, %v341, %v325
  %v346 = vrot.slane %v226, 7
  %v347 = vrot.slane %v230, 7
  %v348 = vrot.slane %v236, 7
  %v349 = vrot.slane %v240, 7
  %vm350 = vcmp.lt.s32.totalorder %v294, 1
  %v351 = vsel %vm350, %v348, %v349
  %v352 = vsel %vm350, %v347, %v348
  %v353 = vsel %vm350, %v346, %v347
  %v354 = vsel %vm350, %v349, %v346
  %v355 = vrot.slane %v279, 1
  %v356 = vrot.slane %v282, 1
  %v357 = vrot.slane %v287, 1
  %v358 = vrot.slane %v290, 1
  %vm359 = vcmp.lt.s32.totalorder %v294, 7
  %v360 = vsel %vm359, %v357, %v358
  %v361 = vsel %vm359, %v356, %v357
  %v362 = vsel %vm359, %v355, %v356
  %v363 = vsel %vm359, %v358, %v355
  %vm364 = vcmp.eq.s32.totalorder %v342, 0
  %vm365 = vcmp.eq.s32.totalorder %v343, 0
  %vm366 = vcmp.eq.s32.totalorder %v344, 0
  %vm367 = vcmp.eq.s32.totalorder %v345, 0
  %v368 = vsel %vm364, 0.0, %v354
  %v369 = vsel %vm365, 0.0, %v353
  %v370 = vsel %vm366, 0.0, %v352
  %v371 = vsel %vm367, 0.0, %v351
  %v372 = vadd.f32 %v228, %v368
  %v373 = vadd.f32 %v232, %v369
  %v374 = vadd.f32 %v238, %v370
  %v375 = vadd.f32 %v242, %v371
  %vm376 = vcmp.eq.s32.totalorder %v342, 15
  %vm377 = vcmp.eq.s32.totalorder %v343, 15
  %vm378 = vcmp.eq.s32.totalorder %v344, 15
  %vm379 = vcmp.eq.s32.totalorder %v345, 15
  %v380 = vsel %vm376, 0.0, %v362
  %v381 = vsel %vm377, 0.0, %v361
  %v382 = vsel %vm378, 0.0, %v360
  %v383 = vsel %vm379, 0.0, %v363
  %v384 = vadd.f32 %v372, %v380
  %v385 = vadd.f32 %v373, %v381
  %v386 = vadd.f32 %v374, %v382
  %v387 = vadd.f32 %v375, %v383
  %v388 = vld [vmem:[%s2] sm:$0x1]
  %v390 = vlaneseq
  %v391 = vshrl.u32 %v390, 7
  %v392 = vsub.s32 0, %v391
  %v393 = vrot.slane %v388, %v392
  %v395 = vadd.f32 %v384, %v393
  %v396 = vadd.f32 %v385, %v393
  %v397 = vadd.f32 %v386, %v393
  %v398 = vadd.f32 %v387, %v393
  %vm399 = vcmp.ge.f32.partialorder %v395, 0.0
  %vm400 = vcmp.ge.f32.partialorder %v396, 0.0
  %vm401 = vcmp.ge.f32.partialorder %v397, 0.0
  %vm402 = vcmp.ge.f32.partialorder %v398, 0.0
  %v403 = vmul.f32 %v395, 0.01
  %v404 = vmul.f32 %v396, 0.01
  %v405 = vmul.f32 %v397, 0.01
  %v406 = vmul.f32 %v398, 0.01
  %v407 = vsel %vm399, %v395, %v403
  %v408 = vsel %vm400, %v396, %v404
  %v409 = vsel %vm401, %v397, %v405
  %v410 = vsel %vm402, %v398, %v406
  %411 = vst [vmem:[%s3] sm:$0xff] %v407
  %412 = vst [vmem:[%s3 + $0x8] sm:$0xff] %v408
  %413 = vst [vmem:[%s3 + $0x10] sm:$0xff] %v409
  %414 = vst [vmem:[%s3 + $0x18] sm:$0xff] %v410
  // Predicated region
  $region14: #{block_forward.1} parent=0 // pred_check
    _
  $region15: #{block_forward.1} parent=0 // pred_check_branch
    %416 = sbr.rel (0) target = $region17
  $region16: #{block_forward.1} parent=0 // pred_region
    _
  $region17: #{block_forward.1} parent=0 // pred_fallthru
    _
  // Predicated region
  $region18: #{block_forward.1} parent=0 // pred_check
    _
  $region19: #{block_forward.1} parent=0 // pred_check_branch
    %418 = sbr.rel (0) target = $region21
  $region20: #{block_forward.1} parent=0 // pred_region
    _
  $region21: #{block_forward.1} parent=0 // pred_fallthru
    _

</llo_original>
